<compile_context>
chip_gen: v5e
topology: v5e:2x2
jax: 0.10.0
libtpu: 0.0.40
codegen_flags: <defaults>
</compile_context>

<pallas_src>
import functools
import math

import jax
import jax.numpy as jnp
from jax.experimental import pallas as pl
from jax.experimental.pallas import tpu as pltpu


# --------------------------- generation gating ------------------------------

def _device_kind():
    try:
        return jax.devices()[0].device_kind.lower()
    except Exception:
        return ""


_KIND = _device_kind()
_IS_V7 = ("v7" in _KIND) or ("7x" in _KIND)
_IS_V6 = "v6" in _KIND

if _IS_V7:
    _VMEM_LIMIT = 52 * 1024 * 1024          # v7x: 64 MiB physical per TC
    _ATTN_TR_MAX = 64
    _TM_MAX = 512
else:
    _VMEM_LIMIT = 96 * 1024 * 1024          # v5e / v6e: 128 MiB physical
    _ATTN_TR_MAX = 128
    _TM_MAX = 1024

# bf16 exp only where the EUP supports it (v6e / v7x); f32 elsewhere.
_EXP_DTYPE = jnp.bfloat16 if (_IS_V6 or _IS_V7) else jnp.float32


def _round_up(x, m):
    return ((x + m - 1) // m) * m


def _pick_tile(m, tmax, align=8):
    """Largest row tile <= tmax that balances tiles to minimise pad waste."""
    if m <= tmax:
        return _round_up(m, align)
    nt = -(-m // tmax)
    return _round_up(-(-m // nt), align)


def _cparams(*sem):
    return pltpu.CompilerParams(dimension_semantics=sem,
                                vmem_limit_bytes=_VMEM_LIMIT)


# ----------------------------- Pallas kernels -------------------------------

def _linear_kernel(x_ref, w_ref, b_ref, *rest, relu, has_res):
    if has_res:
        r_ref, o_ref = rest
    else:
        (o_ref,) = rest
    y = jnp.dot(x_ref[...].astype(jnp.bfloat16), w_ref[...],
                preferred_element_type=jnp.float32) + b_ref[...]
    if has_res:
        y = y + r_ref[...].astype(jnp.float32)
    if relu:
        y = jnp.maximum(y, 0.0)
    o_ref[...] = y.astype(o_ref.dtype)


def pallas_linear(x, w, b, *, residual=None, relu=False,
                  out_dtype=jnp.bfloat16, tm_max=None):
    """(M, K) @ (K, N) + b (+ residual).  bf16 MXU matmul, f32 epilogue, row-tiled."""
    M, K = x.shape
    N = w.shape[1]
    tm = _pick_tile(M, tm_max or _TM_MAX)
    Mp = _round_up(M, tm)
    xp = x if Mp == M else jnp.pad(x, ((0, Mp - M), (0, 0)))
    has_res = residual is not None
    args = [xp, w.astype(jnp.bfloat16), b.reshape(1, N).astype(jnp.float32)]
    in_specs = [pl.BlockSpec((tm, K), lambda i: (i, 0)),
                pl.BlockSpec((K, N), lambda i: (0, 0)),
                pl.BlockSpec((1, N), lambda i: (0, 0))]
    if has_res:
        rp = residual if Mp == M else jnp.pad(residual, ((0, Mp - M), (0, 0)))
        args.append(rp)
        in_specs.append(pl.BlockSpec((tm, N), lambda i: (i, 0)))
    out = pl.pallas_call(
        functools.partial(_linear_kernel, relu=relu, has_res=has_res),
        out_shape=jax.ShapeDtypeStruct((Mp, N), out_dtype),
        grid=(Mp // tm,),
        in_specs=in_specs,
        out_specs=pl.BlockSpec((tm, N), lambda i: (i, 0)),
        compiler_params=_cparams("parallel"),
    )(*args)
    return out if Mp == M else out[:M]


def _mlp_kernel(x_ref, w1_ref, b1_ref, w2_ref, b2_ref, o_ref, *, small_k, relu):
    x = x_ref[...]
    if small_k:
        # K<=8 first layer: unrolled broadcast-FMAs on the VPU, skip the MXU.
        K = x_ref.shape[1]
        xf = x.astype(jnp.float32)
        w1 = w1_ref[...].astype(jnp.float32)
        h = jnp.zeros((x_ref.shape[0], w1_ref.shape[1]), jnp.float32)
        for j in range(K):
            h = h + xf[:, j:j + 1] * w1[j:j + 1, :]
        h = h + b1_ref[...]
    else:
        h = jnp.dot(x.astype(jnp.bfloat16), w1_ref[...],
                    preferred_element_type=jnp.float32) + b1_ref[...]
    if relu:
        h = jnp.maximum(h, 0.0)
    h = h.astype(jnp.bfloat16)                          # intermediate never leaves VMEM
    y = jnp.dot(h, w2_ref[...], preferred_element_type=jnp.float32) + b2_ref[...]
    o_ref[...] = y.astype(o_ref.dtype)


def pallas_mlp(x, w1, b1, w2, b2, *, relu=True, out_dtype=jnp.bfloat16, tm_max=None):
    """Fused Linear (-> ReLU) -> Linear over flattened rows.
    Used for the backbone fc1 pair (relu=True) and the fused fc1+qkv projection
    of each transformer block (relu=False)."""
    M, K = x.shape
    H = w1.shape[1]
    N = w2.shape[1]
    small_k = K <= 8
    tm = _pick_tile(M, tm_max or _TM_MAX)
    Mp = _round_up(M, tm)
    xp = x if Mp == M else jnp.pad(x, ((0, Mp - M), (0, 0)))
    w1p = w1.astype(jnp.float32) if small_k else w1.astype(jnp.bfloat16)
    out = pl.pallas_call(
        functools.partial(_mlp_kernel, small_k=small_k, relu=relu),
        out_shape=jax.ShapeDtypeStruct((Mp, N), out_dtype),
        grid=(Mp // tm,),
        in_specs=[
            pl.BlockSpec((tm, K), lambda i: (i, 0)),
            pl.BlockSpec((K, H), lambda i: (0, 0)),
            pl.BlockSpec((1, H), lambda i: (0, 0)),
            pl.BlockSpec((H, N), lambda i: (0, 0)),
            pl.BlockSpec((1, N), lambda i: (0, 0)),
        ],
        out_specs=pl.BlockSpec((tm, N), lambda i: (i, 0)),
        compiler_params=_cparams("parallel"),
    )(xp, w1p, b1.reshape(1, H).astype(jnp.float32),
      w2.astype(jnp.bfloat16), b2.reshape(1, N).astype(jnp.float32))
    return out if Mp == M else out[:M]


def _point_attn_kernel(q_ref, kf_ref, vf_ref, rel_ref,
                       wd1_ref, bd1_ref, wd2_ref, bd2_ref,
                       w1_ref, b1_ref, w2_ref, b2_ref, o_ref,
                       *, k_valid, exp_dtype):
    tr, k, d = kf_ref.shape

    # ---- fc_delta fused in-tile: Linear(3,d) as 3 VPU FMAs -> ReLU -> MXU Linear(d,d)
    rel = rel_ref[...].astype(jnp.float32).reshape(tr * k, 3)
    wd1 = wd1_ref[...].astype(jnp.float32)                       # (3, d)
    h1 = (rel[:, 0:1] * wd1[0:1, :] + rel[:, 1:2] * wd1[1:2, :]
          + rel[:, 2:3] * wd1[2:3, :] + bd1_ref[...])
    h1 = jnp.maximum(h1, 0.0).astype(jnp.bfloat16)
    pos = jnp.dot(h1, wd2_ref[...], preferred_element_type=jnp.float32) + bd2_ref[...]
    pos3 = pos.reshape(tr, k, d)                                 # (tr, k, d) f32

    # ---- g = q - k + pos  ->  fc_gamma pair (1/sqrt(d) pre-folded into w2/b2)
    q = q_ref[...].astype(jnp.float32)
    g = q[:, None, :] - kf_ref[...].astype(jnp.float32) + pos3
    g2 = g.reshape(tr * k, d).astype(jnp.bfloat16)               # k is a multiple of 8
    h = jnp.dot(g2, w1_ref[...], preferred_element_type=jnp.float32) + b1_ref[...]
    h = jnp.maximum(h, 0.0).astype(jnp.bfloat16)
    z = (jnp.dot(h, w2_ref[...], preferred_element_type=jnp.float32)
         + b2_ref[...]).reshape(tr, k, d)

    # ---- per-channel softmax over neighbours + weighted sum of (v + pos)
    m = jnp.max(z, axis=1, keepdims=True)
    e = jnp.exp((z - m).astype(exp_dtype)).astype(jnp.float32)
    if k_valid < k:                                              # mask padded neighbours
        nbr = jax.lax.broadcasted_iota(jnp.int32, (k, 1), 0)
        e = jnp.where(nbr < k_valid, e, 0.0)
    denom = jnp.sum(e, axis=1)                                   # (tr, d)
    vp = vf_ref[...].astype(jnp.float32) + pos3
    num = jnp.sum(e * vp, axis=1)
    o_ref[...] = (num * pl.reciprocal(denom, approx=True)).astype(o_ref.dtype)


def pallas_point_attention(q, kf, vf, rel, wd1, bd1, wd2, bd2, w1, b1, w2, b2,
                           *, k_valid, out_dtype=jnp.bfloat16):
    """Fused: pos = fc_delta(rel); g = q - k + pos; fc_gamma pair; per-channel
    softmax over neighbours; sum(attn * (v + pos)).  Nothing (k,d)-sized is
    written back to HBM."""
    R, k, d = kf.shape
    tr = _pick_tile(R, _ATTN_TR_MAX)
    Rp = _round_up(R, tr)
    if Rp != R:
        pad3 = ((0, Rp - R), (0, 0), (0, 0))
        q = jnp.pad(q, ((0, Rp - R), (0, 0)))
        kf = jnp.pad(kf, pad3)
        vf = jnp.pad(vf, pad3)
        rel = jnp.pad(rel, pad3)
    out = pl.pallas_call(
        functools.partial(_point_attn_kernel, k_valid=k_valid, exp_dtype=_EXP_DTYPE),
        out_shape=jax.ShapeDtypeStruct((Rp, d), out_dtype),
        grid=(Rp // tr,),
        in_specs=[
            pl.BlockSpec((tr, d), lambda i: (i, 0)),
            pl.BlockSpec((tr, k, d), lambda i: (i, 0, 0)),
            pl.BlockSpec((tr, k, d), lambda i: (i, 0, 0)),
            pl.BlockSpec((tr, k, 3), lambda i: (i, 0, 0)),
            pl.BlockSpec((3, d), lambda i: (0, 0)),
            pl.BlockSpec((1, d), lambda i: (0, 0)),
            pl.BlockSpec((d, d), lambda i: (0, 0)),
            pl.BlockSpec((1, d), lambda i: (0, 0)),
            pl.BlockSpec((d, d), lambda i: (0, 0)),
            pl.BlockSpec((1, d), lambda i: (0, 0)),
            pl.BlockSpec((d, d), lambda i: (0, 0)),
            pl.BlockSpec((1, d), lambda i: (0, 0)),
        ],
        out_specs=pl.BlockSpec((tr, d), lambda i: (i, 0)),
        compiler_params=_cparams("parallel"),
    )(q, kf, vf, rel.astype(jnp.float32),
      wd1.astype(jnp.float32), bd1.reshape(1, d).astype(jnp.float32),
      wd2.astype(jnp.bfloat16), bd2.reshape(1, d).astype(jnp.float32),
      w1.astype(jnp.bfloat16), b1.reshape(1, d).astype(jnp.float32),
      w2.astype(jnp.bfloat16), b2.reshape(1, d).astype(jnp.float32))
    return out if Rp == R else out[:R]


def _conv_stats_kernel(x_ref, scale_ref, shift_ref, w_ref, b_ref,
                       o_ref, sum_ref, sq_ref, *, pre_relu, m_valid, tm):
    x = x_ref[...].astype(jnp.float32) * scale_ref[...] + shift_ref[...]
    if pre_relu:
        x = jnp.maximum(x, 0.0)
    y = jnp.dot(x.astype(jnp.bfloat16), w_ref[...],
                preferred_element_type=jnp.float32) + b_ref[...]
    o_ref[...] = y.astype(o_ref.dtype)

    ym = y
    if m_valid is not None:                               # mask padded rows out of stats
        row = pl.program_id(0) * tm + jax.lax.broadcasted_iota(jnp.int32, (tm, 1), 0)
        ym = jnp.where(row < m_valid, y, 0.0)
    # per-tile partial sums -> keeps the grid "parallel" (megacore on v7x)
    sum_ref[0] = jnp.sum(ym, axis=0, keepdims=True)
    sq_ref[0] = jnp.sum(ym * ym, axis=0, keepdims=True)


def pallas_conv_bn_stats(x, w, b, *, pre_scale=None, pre_shift=None, pre_relu=False,
                         out_dtype=jnp.bfloat16, tm_max=None):
    """1x1-conv (= matmul) with an optional fused pre-BatchNorm+ReLU prologue and
    per-tile partial sum / sum-of-squares outputs (two-pass BN, pass 1).
    The tiny (num_tiles -> 1) reduction is done in plain JAX."""
    M, K = x.shape
    N = w.shape[1]
    if pre_scale is None:
        pre_scale = jnp.ones((K,), jnp.float32)
        pre_shift = jnp.zeros((K,), jnp.float32)
    tm = _pick_tile(M, tm_max or _TM_MAX)
    Mp = _round_up(M, tm)
    nt = Mp // tm
    xp = x if Mp == M else jnp.pad(x, ((0, Mp - M), (0, 0)))
    m_valid = None if Mp == M else M
    out, s, sq = pl.pallas_call(
        functools.partial(_conv_stats_kernel, pre_relu=pre_relu, m_valid=m_valid, tm=tm),
        out_shape=(jax.ShapeDtypeStruct((Mp, N), out_dtype),
                   jax.ShapeDtypeStruct((nt, 1, N), jnp.float32),
                   jax.ShapeDtypeStruct((nt, 1, N), jnp.float32)),
        grid=(nt,),
        in_specs=[
            pl.BlockSpec((tm, K), lambda i: (i, 0)),
            pl.BlockSpec((1, K), lambda i: (0, 0)),
            pl.BlockSpec((1, K), lambda i: (0, 0)),
            pl.BlockSpec((K, N), lambda i: (0, 0)),
            pl.BlockSpec((1, N), lambda i: (0, 0)),
        ],
        out_specs=(pl.BlockSpec((tm, N), lambda i: (i, 0)),
                   pl.BlockSpec((1, 1, N), lambda i: (i, 0, 0)),
                   pl.BlockSpec((1, 1, N), lambda i: (i, 0, 0))),
        compiler_params=_cparams("parallel"),
    )(xp, pre_scale.reshape(1, K).astype(jnp.float32),
      pre_shift.reshape(1, K).astype(jnp.float32),
      w.astype(jnp.bfloat16), b.reshape(1, N).astype(jnp.float32))
    out = out if Mp == M else out[:M]
    return out, jnp.sum(s[:, 0, :], axis=0), jnp.sum(sq[:, 0, :], axis=0)


def _bn_relu_maxpool_kernel(x_ref, scale_ref, shift_ref, o_ref):
    y = x_ref[...].astype(jnp.float32) * scale_ref[...] + shift_ref[...]
    y = jnp.maximum(y, 0.0)
    o_ref[...] = jnp.max(y, axis=1).astype(o_ref.dtype)


def pallas_bn_relu_maxpool(x, scale, shift, *, out_dtype=jnp.bfloat16, tr_max=256):
    """BatchNorm-apply + ReLU + max over the neighbour axis (two-pass BN, pass 2)."""
    R, ns, C = x.shape
    tr = _pick_tile(R, tr_max)
    Rp = _round_up(R, tr)
    xp = x if Rp == R else jnp.pad(x, ((0, Rp - R), (0, 0), (0, 0)))
    out = pl.pallas_call(
        _bn_relu_maxpool_kernel,
        out_shape=jax.ShapeDtypeStruct((Rp, C), out_dtype),
        grid=(Rp // tr,),
        in_specs=[
            pl.BlockSpec((tr, ns, C), lambda i: (i, 0, 0)),
            pl.BlockSpec((1, 1, C), lambda i: (0, 0, 0)),
            pl.BlockSpec((1, 1, C), lambda i: (0, 0, 0)),
        ],
        out_specs=pl.BlockSpec((tr, C), lambda i: (i, 0)),
        compiler_params=_cparams("parallel"),
    )(xp, scale.reshape(1, 1, C).astype(jnp.float32),
      shift.reshape(1, 1, C).astype(jnp.float32))
    return out if Rp == R else out[:R]


def _fps_kernel(xyz_ref, o_ref, dist_ref):
    """Farthest-point sampling for one batch item; everything stays in VMEM.
    xyz_ref: (1, 3, N) f32   o_ref: (1, 1, npoint) int32   dist_ref: (1, N) f32."""
    N = xyz_ref.shape[2]
    npoint = o_ref.shape[2]
    xyz = xyz_ref[0]                                            # (3, N)
    dist_ref[...] = jnp.full((1, N), 1e10, jnp.float32)
    lane_n = jax.lax.broadcasted_iota(jnp.int32, (1, N), 1)
    lane_s = jax.lax.broadcasted_iota(jnp.int32, (1, 1, npoint), 2)
    o_ref[...] = jnp.zeros((1, 1, npoint), jnp.int32)

    def body(i, far):                                           # far: (1, 1) int32
        # record the current farthest index at slot i (one-hot accumulate,
        # avoids any dynamic scalar store)
        o_ref[...] = o_ref[...] + jnp.where(lane_s == i, far, 0)
        # centroid = xyz[:, far] via one-hot select (pure vector ops)
        sel = (lane_n == far).astype(jnp.float32)               # (1, N)
        cx = jnp.sum(xyz[0:1, :] * sel, axis=1, keepdims=True)
        cy = jnp.sum(xyz[1:2, :] * sel, axis=1, keepdims=True)
        cz = jnp.sum(xyz[2:3, :] * sel, axis=1, keepdims=True)
        d = ((xyz[0:1, :] - cx) ** 2 + (xyz[1:2, :] - cy) ** 2
             + (xyz[2:3, :] - cz) ** 2)                         # (1, N)
        nd = jnp.minimum(dist_ref[...], d)
        dist_ref[...] = nd
        # argmax(nd) = first index attaining the max
        m = jnp.max(nd, axis=1, keepdims=True)
        far_new = jnp.min(jnp.where(nd >= m, lane_n, N), axis=1, keepdims=True)
        return far_new.astype(jnp.int32)

    # TODO(synk): torch seeds FPS with torch.randint; we start at index 0.
    jax.lax.fori_loop(0, npoint, body, jnp.zeros((1, 1), jnp.int32))


def pallas_fps(xyz, npoint):
    B, N, _ = xyz.shape
    xyz_t = jnp.transpose(xyz, (0, 2, 1)).astype(jnp.float32)   # (B, 3, N)
    out = pl.pallas_call(
        _fps_kernel,
        out_shape=jax.ShapeDtypeStruct((B, 1, npoint), jnp.int32),
        grid=(B,),
        in_specs=[pl.BlockSpec((1, 3, N), lambda b: (b, 0, 0))],
        out_specs=pl.BlockSpec((1, 1, npoint), lambda b: (b, 0, 0)),
        scratch_shapes=[pltpu.VMEM((1, N), jnp.float32)],
        compiler_params=_cparams("parallel"),
    )(xyz_t)
    return out.reshape(B, npoint)


def _bn_fold(s, sq, count, gamma, beta, eps=1e-5):
    # Train-mode BatchNorm (biased variance), folded to y*scale + shift.
    # TODO(synk): running-stat tracking / eval-mode parity is not implemented.
    mean = s / count
    var = jnp.maximum(sq / count - mean * mean, 0.0)
    scale = gamma * jax.lax.rsqrt(var + eps)
    shift = beta - mean * scale
    return scale, shift


# ------------------------------ JAX glue ops --------------------------------

def square_distance(src, dst):
    return (jnp.sum(src ** 2, -1)[:, :, None]
            + jnp.sum(dst ** 2, -1)[:, None, :]
            - 2.0 * jnp.einsum("bnc,bmc->bnm", src, dst))


def index_points(points, idx):
    B = points.shape[0]
    batch = jnp.arange(B).reshape((B,) + (1,) * (idx.ndim - 1))
    return points[batch, idx]


def knn_indices(query, ref, k):
    d = square_distance(query, ref)
    _, idx = jax.lax.top_k(-d, k)
    return idx


# ---------------------------- parameter init --------------------------------

def init_linear(key, fan_in, fan_out, bias=True):
    kw, kb = jax.random.split(key)
    bound = 1.0 / math.sqrt(fan_in)
    w = jax.random.uniform(kw, (fan_in, fan_out), jnp.float32, -bound, bound)
    b = (jax.random.uniform(kb, (fan_out,), jnp.float32, -bound, bound)
         if bias else jnp.zeros((fan_out,), jnp.float32))
    return {"w": w, "b": b}


def init_transformer_block(key, d_points, d_model):
    ks = jax.random.split(key, 9)
    return {
        "fc1": init_linear(ks[0], d_points, d_model),
        "fc2": init_linear(ks[1], d_model, d_points),
        "fc_delta": [init_linear(ks[2], 3, d_model),
                     init_linear(ks[3], d_model, d_model)],
        "fc_gamma": [init_linear(ks[4], d_model, d_model),
                     init_linear(ks[5], d_model, d_model)],
        "w_qs": init_linear(ks[6], d_model, d_model, bias=False),
        "w_ks": init_linear(ks[7], d_model, d_model, bias=False),
        "w_vs": init_linear(ks[8], d_model, d_model, bias=False),
    }


def init_sa(key, in_channel, mlp):
    layers = []
    last = in_channel
    for out in mlp:
        key, sub = jax.random.split(key)
        layers.append({
            "conv": init_linear(sub, last, out),       # 1x1 Conv2d == Linear over channels
            "bn_gamma": jnp.ones((out,), jnp.float32),
            "bn_beta": jnp.zeros((out,), jnp.float32),
        })
        last = out
    return layers


# ------------------------------ model blocks --------------------------------

def transformer_block(params, xyz, features, nneighbor):
    B, n, _ = xyz.shape
    d_model = params["w_qs"]["w"].shape[1]
    d_out = params["fc2"]["w"].shape[1]
    k_valid = min(nneighbor, n)
    k_pad = _round_up(k_valid, 8)

    knn_idx = knn_indices(xyz, xyz, k_valid)                      # (B, n, k_valid)
    if k_pad != k_valid:
        # pad the neighbour axis to a sublane multiple; padded columns are
        # masked out inside the fused attention kernel.
        rep = jnp.broadcast_to(knn_idx[..., :1], (B, n, k_pad - k_valid))
        knn_idx = jnp.concatenate([knn_idx, rep], axis=-1)
    knn_xyz = index_points(xyz, knn_idx)                          # (B, n, k_pad, 3)

    pre = features                                                # residual (bf16)
    feat2 = features.reshape(B * n, -1)

    # fused fc1 -> merged q/k/v projection; the (tm, d_model) intermediate
    # never leaves VMEM.
    w_qkv = jnp.concatenate([params["w_qs"]["w"], params["w_ks"]["w"],
                             params["w_vs"]["w"]], axis=1)
    qkv = pallas_mlp(feat2, params["fc1"]["w"], params["fc1"]["b"],
                     w_qkv, jnp.zeros((3 * d_model,), jnp.float32),
                     relu=False, out_dtype=jnp.bfloat16)          # (B*n, 3*d_model)
    q = qkv[:, :d_model]
    k_all = qkv[:, d_model:2 * d_model].reshape(B, n, d_model)
    v_all = qkv[:, 2 * d_model:].reshape(B, n, d_model)
    kf = index_points(k_all, knn_idx)                             # (B, n, k_pad, d) bf16
    vf = index_points(v_all, knn_idx)

    rel = xyz[:, :, None, :] - knn_xyz                            # (B, n, k_pad, 3) f32

    # fold the 1/sqrt(d) softmax scale into fc_gamma's second layer (exact)
    scale = 1.0 / math.sqrt(d_model)
    wg2 = params["fc_gamma"][1]["w"] * scale
    bg2 = params["fc_gamma"][1]["b"] * scale

    res = pallas_point_attention(
        q,
        kf.reshape(B * n, k_pad, d_model),
        vf.reshape(B * n, k_pad, d_model),
        rel.reshape(B * n, k_pad, 3),
        params["fc_delta"][0]["w"], params["fc_delta"][0]["b"],
        params["fc_delta"][1]["w"], params["fc_delta"][1]["b"],
        params["fc_gamma"][0]["w"], params["fc_gamma"][0]["b"],
        wg2, bg2, k_valid=k_valid)                                # (B*n, d_model) bf16

    # fc2 with the residual add fused into the epilogue; stream stays bf16
    out = pallas_linear(res, params["fc2"]["w"], params["fc2"]["b"],
                        residual=pre.reshape(B * n, d_out),
                        out_dtype=jnp.bfloat16).reshape(B, n, d_out)
    return out


def transition_down(params, xyz, points, npoint, nsample):
    B, N, _ = xyz.shape
    fps_idx = pallas_fps(xyz, npoint)                             # (B, S) int32
    new_xyz = index_points(xyz, fps_idx)                          # (B, S, 3)
    ns = min(nsample, N)
    idx = knn_indices(new_xyz, xyz, ns)                           # (B, S, ns)
    grouped_xyz = index_points(xyz, idx)
    grouped_xyz_norm = grouped_xyz - new_xyz[:, :, None, :]
    grouped_points = index_points(points, idx)
    new_points = jnp.concatenate([grouped_xyz_norm.astype(jnp.bfloat16),
                                  grouped_points.astype(jnp.bfloat16)], -1)

    M = B * npoint * ns
    y = new_points.reshape(M, -1)
    scale = shift = None
    pre_relu = False
    for layer in params:                    # conv (+stats); BN+ReLU folded forward
        y, s, sq = pallas_conv_bn_stats(y, layer["conv"]["w"], layer["conv"]["b"],
                                        pre_scale=scale, pre_shift=shift,
                                        pre_relu=pre_relu)
        scale, shift = _bn_fold(s, sq, M, layer["bn_gamma"], layer["bn_beta"])
        pre_relu = True
    C = y.shape[-1]
    pooled = pallas_bn_relu_maxpool(y.reshape(B * npoint, ns, C), scale, shift)
    return new_xyz, pooled.reshape(B, npoint, C)


class Backbone:
    # Original hyperparameters: npoints=1024, nblocks=4, nneighbor=16, d_points=3,
    # transformer_dim=512. Exposed so the demo can run at small scale.
    def __init__(self, key, npoints=1024, nblocks=4, nneighbor=16,
                 d_points=3, transformer_dim=512):
        self.npoints, self.nblocks, self.nneighbor = npoints, nblocks, nneighbor
        keys = jax.random.split(key, 3 + 2 * nblocks)
        self.fc1 = [init_linear(keys[0], d_points, 32),
                    init_linear(keys[1], 32, 32)]
        self.transformer1 = init_transformer_block(keys[2], 32, transformer_dim)
        self.transition_downs, self.transformers = [], []
        for i in range(nblocks):
            channel = 32 * 2 ** (i + 1)
            self.transition_downs.append(
                init_sa(keys[3 + 2 * i], channel // 2 + 3, [channel, channel]))
            self.transformers.append(
                init_transformer_block(keys[4 + 2 * i], channel, transformer_dim))

    def __call__(self, x):
        B, N, _ = x.shape
        xyz = x[..., :3]
        # fused fc1 pair: Linear(3,32) -> ReLU -> Linear(32,32); 32-wide
        # intermediate stays in VMEM, K=3 handled on the VPU.
        # Feature / residual stream is kept bf16 in HBM from here on.
        h = pallas_mlp(x.reshape(B * N, -1),
                       self.fc1[0]["w"], self.fc1[0]["b"],
                       self.fc1[1]["w"], self.fc1[1]["b"],
                       relu=True, out_dtype=jnp.bfloat16).reshape(B, N, 32)
        points = transformer_block(self.transformer1, xyz, h, self.nneighbor)
        xyz_and_feats = [(xyz, points)]
        for i in range(self.nblocks):
            npoint = self.npoints // 4 ** (i + 1)
            xyz, points = transition_down(self.transition_downs[i], xyz, points,
                                          npoint, self.nneighbor)
            points = transformer_block(self.transformers[i], xyz, points,
                                       self.nneighbor)
            xyz_and_feats.append((xyz, points))
        return points, xyz_and_feats


# --------------------------------- demo --------------------------------------

if __name__ == "__main__":
    key = jax.random.PRNGKey(0)
    k_params, k_x = jax.random.split(key)

    # Small configuration consistent with the module structure.
    B, N = 2, 128
    nblocks, nneighbor, d_points, transformer_dim = 2, 8, 3, 64
    model = Backbone(k_params, npoints=N, nblocks=nblocks, nneighbor=nneighbor,
                     d_points=d_points, transformer_dim=transformer_dim)

    x = jax.random.normal(k_x, (B, N, d_points), jnp.float32)
    points, xyz_and_feats = model(x)

    jax.block_until_ready(points)
    for xyz_i, feat_i in xyz_and_feats:
        jax.block_until_ready(feat_i)

    assert points.shape == (B, N // 4 ** nblocks, 32 * 2 ** nblocks)
    assert len(xyz_and_feats) == nblocks + 1
    assert bool(jnp.all(jnp.isfinite(points.astype(jnp.float32))))
    print("KERNEL_OK")
</pallas_src>

<mosaic_0001>
module attributes {stable_mosaic.version = 11 : i64} {
  func.func @_mlp_kernel(%arg0: i32, %arg1: memref<256x3xf32, #tpu.memory_space<vmem>>, %arg2: memref<3x32xf32, #tpu.memory_space<vmem>>, %arg3: memref<1x32xf32, #tpu.memory_space<vmem>>, %arg4: memref<32x32xbf16, #tpu.memory_space<vmem>>, %arg5: memref<1x32xf32, #tpu.memory_space<vmem>>, %arg6: memref<256x32xbf16, #tpu.memory_space<vmem>>) attributes {dimension_semantics = [#tpu.dimension_semantics<parallel>], iteration_bounds = array<i64: 1>, scalar_prefetch = 0 : i64, scratch_operands = 0 : i64, tpu.core_type = #tpu.core_type<tc>, window_params = [{transform_indices = @transform_0, window_bounds = array<i64: 256, 3>}, {pipeline_mode = #tpu.pipeline_mode<synchronous>, transform_indices = @transform_1, window_bounds = array<i64: 3, 32>}, {pipeline_mode = #tpu.pipeline_mode<synchronous>, transform_indices = @transform_2, window_bounds = array<i64: 1, 32>}, {pipeline_mode = #tpu.pipeline_mode<synchronous>, transform_indices = @transform_3, window_bounds = array<i64: 32, 32>}, {pipeline_mode = #tpu.pipeline_mode<synchronous>, transform_indices = @transform_4, window_bounds = array<i64: 1, 32>}, {transform_indices = @transform_5, window_bounds = array<i64: 256, 32>}]} {
    %c0 = arith.constant 0 : index
    %c0_0 = arith.constant 0 : index
    %0 = vector.load %arg1[%c0, %c0_0] : memref<256x3xf32, #tpu.memory_space<vmem>>, vector<256x3xf32>
    %c0_1 = arith.constant 0 : index
    %c0_2 = arith.constant 0 : index
    %1 = vector.load %arg2[%c0_1, %c0_2] : memref<3x32xf32, #tpu.memory_space<vmem>>, vector<3x32xf32>
    %cst = arith.constant 0.000000e+00 : f32
    %2 = vector.broadcast %cst : f32 to vector<256x32xf32>
    %3 = vector.extract_strided_slice %0 {offsets = [0, 0], sizes = [256, 1], strides = [1, 1]} : vector<256x3xf32> to vector<256x1xf32>
    %4 = vector.extract_strided_slice %1 {offsets = [0, 0], sizes = [1, 32], strides = [1, 1]} : vector<3x32xf32> to vector<1x32xf32>
    %5 = vector.broadcast %3 : vector<256x1xf32> to vector<256x32xf32>
    %6 = vector.broadcast %4 : vector<1x32xf32> to vector<256x32xf32>
    %7 = arith.mulf %5, %6 : vector<256x32xf32>
    %8 = arith.addf %2, %7 : vector<256x32xf32>
    %9 = vector.extract_strided_slice %0 {offsets = [0, 1], sizes = [256, 1], strides = [1, 1]} : vector<256x3xf32> to vector<256x1xf32>
    %10 = vector.extract_strided_slice %1 {offsets = [1, 0], sizes = [1, 32], strides = [1, 1]} : vector<3x32xf32> to vector<1x32xf32>
    %11 = vector.broadcast %9 : vector<256x1xf32> to vector<256x32xf32>
    %12 = vector.broadcast %10 : vector<1x32xf32> to vector<256x32xf32>
    %13 = arith.mulf %11, %12 : vector<256x32xf32>
    %14 = arith.addf %8, %13 : vector<256x32xf32>
    %15 = vector.extract_strided_slice %0 {offsets = [0, 2], sizes = [256, 1], strides = [1, 1]} : vector<256x3xf32> to vector<256x1xf32>
    %16 = vector.extract_strided_slice %1 {offsets = [2, 0], sizes = [1, 32], strides = [1, 1]} : vector<3x32xf32> to vector<1x32xf32>
    %17 = vector.broadcast %15 : vector<256x1xf32> to vector<256x32xf32>
    %18 = vector.broadcast %16 : vector<1x32xf32> to vector<256x32xf32>
    %19 = arith.mulf %17, %18 : vector<256x32xf32>
    %20 = arith.addf %14, %19 : vector<256x32xf32>
    %c0_3 = arith.constant 0 : index
    %c0_4 = arith.constant 0 : index
    %21 = vector.load %arg3[%c0_3, %c0_4] : memref<1x32xf32, #tpu.memory_space<vmem>>, vector<1x32xf32>
    %22 = vector.broadcast %21 : vector<1x32xf32> to vector<256x32xf32>
    %23 = arith.addf %20, %22 : vector<256x32xf32>
    %cst_5 = arith.constant 0.000000e+00 : f32
    %24 = vector.broadcast %cst_5 : f32 to vector<256x32xf32>
    %25 = arith.maximumf %23, %24 : vector<256x32xf32>
    %26 = arith.truncf %25 : vector<256x32xf32> to vector<256x32xbf16>
    %c0_6 = arith.constant 0 : index
    %c0_7 = arith.constant 0 : index
    %27 = vector.load %arg4[%c0_6, %c0_7] : memref<32x32xbf16, #tpu.memory_space<vmem>>, vector<32x32xbf16>
    %cst_8 = arith.constant dense<0.000000e+00> : vector<256x32xf32>
    %28 = tpu.matmul %26, %27, %cst_8 {dimension_numbers = #tpu.dot_dimension_numbers<[1], [0], [0], [1], [0, 0, 1, 1], [], []>} : vector<256x32xbf16>, vector<32x32xbf16>, vector<256x32xf32> -> vector<256x32xf32>
    %c0_9 = arith.constant 0 : index
    %c0_10 = arith.constant 0 : index
    %29 = vector.load %arg5[%c0_9, %c0_10] : memref<1x32xf32, #tpu.memory_space<vmem>>, vector<1x32xf32>
    %30 = vector.broadcast %29 : vector<1x32xf32> to vector<256x32xf32>
    %31 = arith.addf %28, %30 : vector<256x32xf32>
    %32 = arith.truncf %31 : vector<256x32xf32> to vector<256x32xbf16>
    %c0_11 = arith.constant 0 : index
    %c0_12 = arith.constant 0 : index
    %33 = vector.load %arg6[%c0_11, %c0_12] : memref<256x32xbf16, #tpu.memory_space<vmem>>, vector<256x32xbf16>
    tpu.vector_store %arg6[%c0_11, %c0_12], %32 {strides = array<i32>} : memref<256x32xbf16, #tpu.memory_space<vmem>>, vector<256x32xbf16>,
    return
  }
  func.func @transform_0(%arg0: i32) -> (i32, i32) {
    %c0_i32 = arith.constant 0 : i32
    %c0_i32_0 = arith.constant 0 : i32
    return %arg0, %c0_i32 : i32, i32
  }
  func.func @transform_1(%arg0: i32) -> (i32, i32) {
    %c0_i32 = arith.constant 0 : i32
    %c0_i32_0 = arith.constant 0 : i32
    %c0_i32_1 = arith.constant 0 : i32
    return %c0_i32, %c0_i32_0 : i32, i32
  }
  func.func @transform_2(%arg0: i32) -> (i32, i32) {
    %c0_i32 = arith.constant 0 : i32
    %c0_i32_0 = arith.constant 0 : i32
    %c0_i32_1 = arith.constant 0 : i32
    return %c0_i32, %c0_i32_0 : i32, i32
  }
  func.func @transform_3(%arg0: i32) -> (i32, i32) {
    %c0_i32 = arith.constant 0 : i32
    %c0_i32_0 = arith.constant 0 : i32
    %c0_i32_1 = arith.constant 0 : i32
    return %c0_i32, %c0_i32_0 : i32, i32
  }
  func.func @transform_4(%arg0: i32) -> (i32, i32) {
    %c0_i32 = arith.constant 0 : i32
    %c0_i32_0 = arith.constant 0 : i32
    %c0_i32_1 = arith.constant 0 : i32
    return %c0_i32, %c0_i32_0 : i32, i32
  }
  func.func @transform_5(%arg0: i32) -> (i32, i32) {
    %c0_i32 = arith.constant 0 : i32
    %c0_i32_0 = arith.constant 0 : i32
    return %arg0, %c0_i32 : i32, i32
  }
}

</mosaic_0001>

<llo_original>
// kernel: tpu_custom_call.1
$region0: #{tpu_custom_call.1}
  #allocation0 [shape = 'u32[]', space=smem, size = 0x4, offset = 0x4, fixed_abs, tag = 'smem constant byte address 0x4 - core index']
  #allocation1 [shape = 'u32[72,128]{1,0:T(1,128)}', space=vmem, size = 0x9000, scoped, tag = 'internal scratch']
  %s0 = inlined_call_operand.vmem [shape: f32[256,3], index: 0, kind: input, shape index: {}]
  %s1 = inlined_call_operand.vmem [shape: f32[3,32], index: 1, kind: input, shape index: {}]
  %s2 = inlined_call_operand.vmem [shape: f32[1,32], index: 2, kind: input, shape index: {}]
  %s3 = inlined_call_operand.vmem [shape: bf16[32,32], index: 3, kind: input, shape index: {}]
  %s4 = inlined_call_operand.vmem [shape: f32[1,32], index: 4, kind: input, shape index: {}]
  %s5 = inlined_call_operand.vmem [shape: bf16[256,32], index: 5, kind: output, shape index: {}]
  %s6 = sld [smem:[#allocation0]]
  $region30: #{tpu_custom_call.1} parent=0
    _
  %s8 = ssub.s32 1, %s6
  %s9 = scalar_select 0, %s8, %s6
  // Predicated region
  $region2: #{tpu_custom_call.1} parent=0 // pred_check
    _
  $region3: #{tpu_custom_call.1} parent=0 // pred_check_branch
    %11 = sbr.rel (0) target = $region5
  $region4: #{tpu_custom_call.1} parent=0 // pred_region
    _
  $region5: #{tpu_custom_call.1} parent=0 // pred_fallthru
    _
  // Predicated region
  $region6: #{tpu_custom_call.1} parent=0 // pred_check
    _
  $region7: #{tpu_custom_call.1} parent=0 // pred_check_branch
    %13 = sbr.rel (0) target = $region9
  $region8: #{tpu_custom_call.1} parent=0 // pred_region
    _
  $region9: #{tpu_custom_call.1} parent=0 // pred_fallthru
    _
  // Predicated region
  $region10: #{tpu_custom_call.1} parent=0 // pred_check
    _
  $region11: #{tpu_custom_call.1} parent=0 // pred_check_branch
    %15 = sbr.rel (0) target = $region13
  $region12: #{tpu_custom_call.1} parent=0 // pred_region
    _
  $region13: #{tpu_custom_call.1} parent=0 // pred_fallthru
    _
  // Predicated region
  $region14: #{tpu_custom_call.1} parent=0 // pred_check
    _
  $region15: #{tpu_custom_call.1} parent=0 // pred_check_branch
    %17 = sbr.rel (0) target = $region17
  $region16: #{tpu_custom_call.1} parent=0 // pred_region
    _
  $region17: #{tpu_custom_call.1} parent=0 // pred_fallthru
    _
  // Predicated region
  $region18: #{tpu_custom_call.1} parent=0 // pred_check
    _
  $region19: #{tpu_custom_call.1} parent=0 // pred_check_branch
    %19 = sbr.rel (0) target = $region21
  $region20: #{tpu_custom_call.1} parent=0 // pred_region
    _
  $region21: #{tpu_custom_call.1} parent=0 // pred_fallthru
    _
  %v21 = vld [vmem:[%s0] sm:$0xff]
  %v22 = vld [vmem:[%s0 + $0x8] sm:$0xff]
  %v23 = vld [vmem:[%s0 + $0x10] sm:$0xff]
  %v24 = vld [vmem:[%s0 + $0x18] sm:$0xff]
  %v25 = vld [vmem:[%s0 + $0x20] sm:$0xff]
  %v26 = vld [vmem:[%s0 + $0x28] sm:$0xff]
  %v27 = vld [vmem:[%s0 + $0x30] sm:$0xff]
  %v28 = vld [vmem:[%s0 + $0x38] sm:$0xff]
  %v29 = vld [vmem:[%s0 + $0x40] sm:$0xff]
  %v30 = vld [vmem:[%s0 + $0x48] sm:$0xff]
  %v31 = vld [vmem:[%s0 + $0x50] sm:$0xff]
  %v32 = vld [vmem:[%s0 + $0x58] sm:$0xff]
  %v33 = vld [vmem:[%s0 + $0x60] sm:$0xff]
  %v34 = vld [vmem:[%s0 + $0x68] sm:$0xff]
  %v35 = vld [vmem:[%s0 + $0x70] sm:$0xff]
  %v36 = vld [vmem:[%s0 + $0x78] sm:$0xff]
  %v37 = vld [vmem:[%s0 + $0x80] sm:$0xff]
  %v38 = vld [vmem:[%s0 + $0x88] sm:$0xff]
  %v39 = vld [vmem:[%s0 + $0x90] sm:$0xff]
  %v40 = vld [vmem:[%s0 + $0x98] sm:$0xff]
  %v41 = vld [vmem:[%s0 + $0xa0] sm:$0xff]
  %v42 = vld [vmem:[%s0 + $0xa8] sm:$0xff]
  %v43 = vld [vmem:[%s0 + $0xb0] sm:$0xff]
  %v44 = vld [vmem:[%s0 + $0xb8] sm:$0xff]
  %v45 = vld [vmem:[%s0 + $0xc0] sm:$0xff]
  %v46 = vld [vmem:[%s0 + $0xc8] sm:$0xff]
  %v47 = vld [vmem:[%s0 + $0xd0] sm:$0xff]
  %v48 = vld [vmem:[%s0 + $0xd8] sm:$0xff]
  %v49 = vld [vmem:[%s0 + $0xe0] sm:$0xff]
  %v50 = vld [vmem:[%s0 + $0xe8] sm:$0xff]
  %v51 = vld [vmem:[%s0 + $0xf0] sm:$0xff]
  %v52 = vld [vmem:[%s0 + $0xf8] sm:$0xff]
  %v53 = vld [vmem:[%s1] sm:$0x7]
  %55 = vset.pattern.permute.xlu0 0
  %56 = vperm.xlu0 %55, %v21
  %v57 = vpop.permute.xlu0 %56
  %60 = vset.pattern.permute.xlu0 0
  %61 = vperm.xlu0 %60, %v22
  %v62 = vpop.permute.xlu0 %61
  %65 = vset.pattern.permute.xlu0 0
  %66 = vperm.xlu0 %65, %v23
  %v67 = vpop.permute.xlu0 %66
  %70 = vset.pattern.permute.xlu0 0
  %71 = vperm.xlu0 %70, %v24
  %v72 = vpop.permute.xlu0 %71
  %75 = vset.pattern.permute.xlu0 0
  %76 = vperm.xlu0 %75, %v25
  %v77 = vpop.permute.xlu0 %76
  %80 = vset.pattern.permute.xlu0 0
  %81 = vperm.xlu0 %80, %v26
  %v82 = vpop.permute.xlu0 %81
  %85 = vset.pattern.permute.xlu0 0
  %86 = vperm.xlu0 %85, %v27
  %v87 = vpop.permute.xlu0 %86
  %90 = vset.pattern.permute.xlu0 0
  %91 = vperm.xlu0 %90, %v28
  %v92 = vpop.permute.xlu0 %91
  %95 = vset.pattern.permute.xlu0 0
  %96 = vperm.xlu0 %95, %v29
  %v97 = vpop.permute.xlu0 %96
  %100 = vset.pattern.permute.xlu0 0
  %101 = vperm.xlu0 %100, %v30
  %v102 = vpop.permute.xlu0 %101
  %105 = vset.pattern.permute.xlu0 0
  %106 = vperm.xlu0 %105, %v31
  %v107 = vpop.permute.xlu0 %106
  %110 = vset.pattern.permute.xlu0 0
  %111 = vperm.xlu0 %110, %v32
  %v112 = vpop.permute.xlu0 %111
  %115 = vset.pattern.permute.xlu0 0
  %116 = vperm.xlu0 %115, %v33
  %v117 = vpop.permute.xlu0 %116
  %120 = vset.pattern.permute.xlu0 0
  %121 = vperm.xlu0 %120, %v34
  %v122 = vpop.permute.xlu0 %121
  %125 = vset.pattern.permute.xlu0 0
  %126 = vperm.xlu0 %125, %v35
  %v127 = vpop.permute.xlu0 %126
  %130 = vset.pattern.permute.xlu0 0
  %131 = vperm.xlu0 %130, %v36
  %v132 = vpop.permute.xlu0 %131
  %135 = vset.pattern.permute.xlu0 0
  %136 = vperm.xlu0 %135, %v37
  %v137 = vpop.permute.xlu0 %136
  %140 = vset.pattern.permute.xlu0 0
  %141 = vperm.xlu0 %140, %v38
  %v142 = vpop.permute.xlu0 %141
  %145 = vset.pattern.permute.xlu0 0
  %146 = vperm.xlu0 %145, %v39
  %v147 = vpop.permute.xlu0 %146
  %150 = vset.pattern.permute.xlu0 0
  %151 = vperm.xlu0 %150, %v40
  %v152 = vpop.permute.xlu0 %151
  %155 = vset.pattern.permute.xlu0 0
  %156 = vperm.xlu0 %155, %v41
  %v157 = vpop.permute.xlu0 %156
  %160 = vset.pattern.permute.xlu0 0
  %161 = vperm.xlu0 %160, %v42
  %v162 = vpop.permute.xlu0 %161
  %165 = vset.pattern.permute.xlu0 0
  %166 = vperm.xlu0 %165, %v43
  %v167 = vpop.permute.xlu0 %166
  %170 = vset.pattern.permute.xlu0 0
  %171 = vperm.xlu0 %170, %v44
  %v172 = vpop.permute.xlu0 %171
  %175 = vset.pattern.permute.xlu0 0
  %176 = vperm.xlu0 %175, %v45
  %v177 = vpop.permute.xlu0 %176
  %180 = vset.pattern.permute.xlu0 0
  %181 = vperm.xlu0 %180, %v46
  %v182 = vpop.permute.xlu0 %181
  %185 = vset.pattern.permute.xlu0 0
  %186 = vperm.xlu0 %185, %v47
  %v187 = vpop.permute.xlu0 %186
  %190 = vset.pattern.permute.xlu0 0
  %191 = vperm.xlu0 %190, %v48
  %v192 = vpop.permute.xlu0 %191
  %195 = vset.pattern.permute.xlu0 0
  %196 = vperm.xlu0 %195, %v49
  %v197 = vpop.permute.xlu0 %196
  %200 = vset.pattern.permute.xlu0 0
  %201 = vperm.xlu0 %200, %v50
  %v202 = vpop.permute.xlu0 %201
  %205 = vset.pattern.permute.xlu0 0
  %206 = vperm.xlu0 %205, %v51
  %v207 = vpop.permute.xlu0 %206
  %210 = vset.pattern.permute.xlu0 0
  %211 = vperm.xlu0 %210, %v52
  %v212 = vpop.permute.xlu0 %211
  %v214 = vperm.slane %v53, 0
  %v215 = vmul.f32 %v57, %v214
  %v216 = vmul.f32 %v62, %v214
  %v217 = vmul.f32 %v67, %v214
  %v218 = vmul.f32 %v72, %v214
  %v219 = vmul.f32 %v77, %v214
  %v220 = vmul.f32 %v82, %v214
  %v221 = vmul.f32 %v87, %v214
  %v222 = vmul.f32 %v92, %v214
  %v223 = vmul.f32 %v97, %v214
  %v224 = vmul.f32 %v102, %v214
  %v225 = vmul.f32 %v107, %v214
  %v226 = vmul.f32 %v112, %v214
  %v227 = vmul.f32 %v117, %v214
  %v228 = vmul.f32 %v122, %v214
  %v229 = vmul.f32 %v127, %v214
  %v230 = vmul.f32 %v132, %v214
  %v231 = vmul.f32 %v137, %v214
  %v232 = vmul.f32 %v142, %v214
  %v233 = vmul.f32 %v147, %v214
  %v234 = vmul.f32 %v152, %v214
  %v235 = vmul.f32 %v157, %v214
  %v236 = vmul.f32 %v162, %v214
  %v237 = vmul.f32 %v167, %v214
  %v238 = vmul.f32 %v172, %v214
  %v239 = vmul.f32 %v177, %v214
  %v240 = vmul.f32 %v182, %v214
  %v241 = vmul.f32 %v187, %v214
  %v242 = vmul.f32 %v192, %v214
  %v243 = vmul.f32 %v197, %v214
  %v244 = vmul.f32 %v202, %v214
  %v245 = vmul.f32 %v207, %v214
  %v246 = vmul.f32 %v212, %v214
  %v247 = vadd.f32 %v215, 0.0
  %v248 = vadd.f32 %v216, 0.0
  %v249 = vadd.f32 %v217, 0.0
  %v250 = vadd.f32 %v218, 0.0
  %v251 = vadd.f32 %v219, 0.0
  %v252 = vadd.f32 %v220, 0.0
  %v253 = vadd.f32 %v221, 0.0
  %v254 = vadd.f32 %v222, 0.0
  %v255 = vadd.f32 %v223, 0.0
  %v256 = vadd.f32 %v224, 0.0
  %v257 = vadd.f32 %v225, 0.0
  %v258 = vadd.f32 %v226, 0.0
  %v259 = vadd.f32 %v227, 0.0
  %v260 = vadd.f32 %v228, 0.0
  %v261 = vadd.f32 %v229, 0.0
  %v262 = vadd.f32 %v230, 0.0
  %v263 = vadd.f32 %v231, 0.0
  %v264 = vadd.f32 %v232, 0.0
  %v265 = vadd.f32 %v233, 0.0
  %v266 = vadd.f32 %v234, 0.0
  %v267 = vadd.f32 %v235, 0.0
  %v268 = vadd.f32 %v236, 0.0
  %v269 = vadd.f32 %v237, 0.0
  %v270 = vadd.f32 %v238, 0.0
  %v271 = vadd.f32 %v239, 0.0
  %v272 = vadd.f32 %v240, 0.0
  %v273 = vadd.f32 %v241, 0.0
  %v274 = vadd.f32 %v242, 0.0
  %v275 = vadd.f32 %v243, 0.0
  %v276 = vadd.f32 %v244, 0.0
  %v277 = vadd.f32 %v245, 0.0
  %v278 = vadd.f32 %v246, 0.0
  %279 = vset.pattern.permute.xlu0 1
  %280 = vperm.xlu0 %279, %v21
  %v281 = vpop.permute.xlu0 %280
  %283 = vset.pattern.permute.xlu0 1
  %284 = vperm.xlu0 %283, %v22
  %v285 = vpop.permute.xlu0 %284
  %287 = vset.pattern.permute.xlu0 1
  %288 = vperm.xlu0 %287, %v23
  %v289 = vpop.permute.xlu0 %288
  %291 = vset.pattern.permute.xlu0 1
  %292 = vperm.xlu0 %291, %v24
  %v293 = vpop.permute.xlu0 %292
  %295 = vset.pattern.permute.xlu0 1
  %296 = vperm.xlu0 %295, %v25
  %v297 = vpop.permute.xlu0 %296
  %299 = vset.pattern.permute.xlu0 1
  %300 = vperm.xlu0 %299, %v26
  %v301 = vpop.permute.xlu0 %300
  %303 = vset.pattern.permute.xlu0 1
  %304 = vperm.xlu0 %303, %v27
  %v305 = vpop.permute.xlu0 %304
  %307 = vset.pattern.permute.xlu0 1
  %308 = vperm.xlu0 %307, %v28
  %v309 = vpop.permute.xlu0 %308
  %311 = vset.pattern.permute.xlu0 1
  %312 = vperm.xlu0 %311, %v29
  %v313 = vpop.permute.xlu0 %312
  %315 = vset.pattern.permute.xlu0 1
  %316 = vperm.xlu0 %315, %v30
  %v317 = vpop.permute.xlu0 %316
  %319 = vset.pattern.permute.xlu0 1
  %320 = vperm.xlu0 %319, %v31
  %v321 = vpop.permute.xlu0 %320
  %323 = vset.pattern.permute.xlu0 1
  %324 = vperm.xlu0 %323, %v32
  %v325 = vpop.permute.xlu0 %324
  %327 = vset.pattern.permute.xlu0 1
  %328 = vperm.xlu0 %327, %v33
  %v329 = vpop.permute.xlu0 %328
  %331 = vset.pattern.permute.xlu0 1
  %332 = vperm.xlu0 %331, %v34
  %v333 = vpop.permute.xlu0 %332
  %335 = vset.pattern.permute.xlu0 1
  %336 = vperm.xlu0 %335, %v35
  %v337 = vpop.permute.xlu0 %336
  %339 = vset.pattern.permute.xlu0 1
  %340 = vperm.xlu0 %339, %v36
  %v341 = vpop.permute.xlu0 %340
  %343 = vset.pattern.permute.xlu0 1
  %344 = vperm.xlu0 %343, %v37
  %v345 = vpop.permute.xlu0 %344
  %347 = vset.pattern.permute.xlu0 1
  %348 = vperm.xlu0 %347, %v38
  %v349 = vpop.permute.xlu0 %348
  %351 = vset.pattern.permute.xlu0 1
  %352 = vperm.xlu0 %351, %v39
  %v353 = vpop.permute.xlu0 %352
  %355 = vset.pattern.permute.xlu0 1
  %356 = vperm.xlu0 %355, %v40
  %v357 = vpop.permute.xlu0 %356
  %359 = vset.pattern.permute.xlu0 1
  %360 = vperm.xlu0 %359, %v41
  %v361 = vpop.permute.xlu0 %360
  %363 = vset.pattern.permute.xlu0 1
  %364 = vperm.xlu0 %363, %v42
  %v365 = vpop.permute.xlu0 %364
  %367 = vset.pattern.permute.xlu0 1
  %368 = vperm.xlu0 %367, %v43
  %v369 = vpop.permute.xlu0 %368
  %371 = vset.pattern.permute.xlu0 1
  %372 = vperm.xlu0 %371, %v44
  %v373 = vpop.permute.xlu0 %372
  %375 = vset.pattern.permute.xlu0 1
  %376 = vperm.xlu0 %375, %v45
  %v377 = vpop.permute.xlu0 %376
  %379 = vset.pattern.permute.xlu0 1
  %380 = vperm.xlu0 %379, %v46
  %v381 = vpop.permute.xlu0 %380
  %383 = vset.pattern.permute.xlu0 1
  %384 = vperm.xlu0 %383, %v47
  %v385 = vpop.permute.xlu0 %384
  %387 = vset.pattern.permute.xlu0 1
  %388 = vperm.xlu0 %387, %v48
  %v389 = vpop.permute.xlu0 %388
  %391 = vset.pattern.permute.xlu0 1
  %392 = vperm.xlu0 %391, %v49
  %v393 = vpop.permute.xlu0 %392
  %395 = vset.pattern.permute.xlu0 1
  %396 = vperm.xlu0 %395, %v50
  %v397 = vpop.permute.xlu0 %396
  %399 = vset.pattern.permute.xlu0 1
  %400 = vperm.xlu0 %399, %v51
  %v401 = vpop.permute.xlu0 %400
  %403 = vset.pattern.permute.xlu0 1
  %404 = vperm.xlu0 %403, %v52
  %v405 = vpop.permute.xlu0 %404
  %v407 = vperm.slane %v53, 1
  %v408 = vmul.f32 %v281, %v407
  %v409 = vmul.f32 %v285, %v407
  %v410 = vmul.f32 %v289, %v407
  %v411 = vmul.f32 %v293, %v407
  %v412 = vmul.f32 %v297, %v407
  %v413 = vmul.f32 %v301, %v407
  %v414 = vmul.f32 %v305, %v407
  %v415 = vmul.f32 %v309, %v407
  %v416 = vmul.f32 %v313, %v407
  %v417 = vmul.f32 %v317, %v407
  %v418 = vmul.f32 %v321, %v407
  %v419 = vmul.f32 %v325, %v407
  %v420 = vmul.f32 %v329, %v407
  %v421 = vmul.f32 %v333, %v407
  %v422 = vmul.f32 %v337, %v407
  %v423 = vmul.f32 %v341, %v407
  %v424 = vmul.f32 %v345, %v407
  %v425 = vmul.f32 %v349, %v407
  %v426 = vmul.f32 %v353, %v407
  %v427 = vmul.f32 %v357, %v407
  %v428 = vmul.f32 %v361, %v407
  %v429 = vmul.f32 %v365, %v407
  %v430 = vmul.f32 %v369, %v407
  %v431 = vmul.f32 %v373, %v407
  %v432 = vmul.f32 %v377, %v407
  %v433 = vmul.f32 %v381, %v407
  %v434 = vmul.f32 %v385, %v407
  %v435 = vmul.f32 %v389, %v407
  %v436 = vmul.f32 %v393, %v407
  %v437 = vmul.f32 %v397, %v407
  %v438 = vmul.f32 %v401, %v407
  %v439 = vmul.f32 %v405, %v407
  %v440 = vadd.f32 %v247, %v408
  %v441 = vadd.f32 %v248, %v409
  %v442 = vadd.f32 %v249, %v410
  %v443 = vadd.f32 %v250, %v411
  %v444 = vadd.f32 %v251, %v412
  %v445 = vadd.f32 %v252, %v413
  %v446 = vadd.f32 %v253, %v414
  %v447 = vadd.f32 %v254, %v415
  %v448 = vadd.f32 %v255, %v416
  %v449 = vadd.f32 %v256, %v417
  %v450 = vadd.f32 %v257, %v418
  %v451 = vadd.f32 %v258, %v419
  %v452 = vadd.f32 %v259, %v420
  %v453 = vadd.f32 %v260, %v421
  %v454 = vadd.f32 %v261, %v422
  %v455 = vadd.f32 %v262, %v423
  %v456 = vadd.f32 %v263, %v424
  %v457 = vadd.f32 %v264, %v425
  %v458 = vadd.f32 %v265, %v426
  %v459 = vadd.f32 %v266, %v427
  %v460 = vadd.f32 %v267, %v428
  %v461 = vadd.f32 %v268, %v429
  %v462 = vadd.f32 %v269, %v430
  %v463 = vadd.f32 %v270, %v431
  %v464 = vadd.f32 %v271, %v432
  %v465 = vadd.f32 %v272, %v433
  %v466 = vadd.f32 %v273, %v434
  %v467 = vadd.f32 %v274, %v435
  %v468 = vadd.f32 %v275, %v436
  %v469 = vadd.f32 %v276, %v437
  %v470 = vadd.f32 %v277, %v438
  %v471 = vadd.f32 %v278, %v439
  %472 = vset.pattern.permute.xlu0 2
  %473 = vperm.xlu0 %472, %v21
  %v474 = vpop.permute.xlu0 %473
  %476 = vset.pattern.permute.xlu0 2
  %477 = vperm.xlu0 %476, %v22
  %v478 = vpop.permute.xlu0 %477
  %480 = vset.pattern.permute.xlu0 2
  %481 = vperm.xlu0 %480, %v23
  %v482 = vpop.permute.xlu0 %481
  %484 = vset.pattern.permute.xlu0 2
  %485 = vperm.xlu0 %484, %v24
  %v486 = vpop.permute.xlu0 %485
  %488 = vset.pattern.permute.xlu0 2
  %489 = vperm.xlu0 %488, %v25
  %v490 = vpop.permute.xlu0 %489
  %492 = vset.pattern.permute.xlu0 2
  %493 = vperm.xlu0 %492, %v26
  %v494 = vpop.permute.xlu0 %493
  %496 = vset.pattern.permute.xlu0 2
  %497 = vperm.xlu0 %496, %v27
  %v498 = vpop.permute.xlu0 %497
  %500 = vset.pattern.permute.xlu0 2
  %501 = vperm.xlu0 %500, %v28
  %v502 = vpop.permute.xlu0 %501
  %504 = vset.pattern.permute.xlu0 2
  %505 = vperm.xlu0 %504, %v29
  %v506 = vpop.permute.xlu0 %505
  %508 = vset.pattern.permute.xlu0 2
  %509 = vperm.xlu0 %508, %v30
  %v510 = vpop.permute.xlu0 %509
  %512 = vset.pattern.permute.xlu0 2
  %513 = vperm.xlu0 %512, %v31
  %v514 = vpop.permute.xlu0 %513
  %516 = vset.pattern.permute.xlu0 2
  %517 = vperm.xlu0 %516, %v32
  %v518 = vpop.permute.xlu0 %517
  %520 = vset.pattern.permute.xlu0 2
  %521 = vperm.xlu0 %520, %v33
  %v522 = vpop.permute.xlu0 %521
  %524 = vset.pattern.permute.xlu0 2
  %525 = vperm.xlu0 %524, %v34
  %v526 = vpop.permute.xlu0 %525
  %528 = vset.pattern.permute.xlu0 2
  %529 = vperm.xlu0 %528, %v35
  %v530 = vpop.permute.xlu0 %529
  %532 = vset.pattern.permute.xlu0 2
  %533 = vperm.xlu0 %532, %v36
  %v534 = vpop.permute.xlu0 %533
  %536 = vset.pattern.permute.xlu0 2
  %537 = vperm.xlu0 %536, %v37
  %v538 = vpop.permute.xlu0 %537
  %540 = vset.pattern.permute.xlu0 2
  %541 = vperm.xlu0 %540, %v38
  %v542 = vpop.permute.xlu0 %541
  %544 = vset.pattern.permute.xlu0 2
  %545 = vperm.xlu0 %544, %v39
  %v546 = vpop.permute.xlu0 %545
  %548 = vset.pattern.permute.xlu0 2
  %549 = vperm.xlu0 %548, %v40
  %v550 = vpop.permute.xlu0 %549
  %552 = vset.pattern.permute.xlu0 2
  %553 = vperm.xlu0 %552, %v41
  %v554 = vpop.permute.xlu0 %553
  %556 = vset.pattern.permute.xlu0 2
  %557 = vperm.xlu0 %556, %v42
  %v558 = vpop.permute.xlu0 %557
  %560 = vset.pattern.permute.xlu0 2
  %561 = vperm.xlu0 %560, %v43
  %v562 = vpop.permute.xlu0 %561
  %564 = vset.pattern.permute.xlu0 2
  %565 = vperm.xlu0 %564, %v44
  %v566 = vpop.permute.xlu0 %565
  %568 = vset.pattern.permute.xlu0 2
  %569 = vperm.xlu0 %568, %v45
  %v570 = vpop.permute.xlu0 %569
  %572 = vset.pattern.permute.xlu0 2
  %573 = vperm.xlu0 %572, %v46
  %v574 = vpop.permute.xlu0 %573
  %576 = vset.pattern.permute.xlu0 2
  %577 = vperm.xlu0 %576, %v47
  %v578 = vpop.permute.xlu0 %577
  %580 = vset.pattern.permute.xlu0 2
  %581 = vperm.xlu0 %580, %v48
  %v582 = vpop.permute.xlu0 %581
  %584 = vset.pattern.permute.xlu0 2
  %585 = vperm.xlu0 %584, %v49
  %v586 = vpop.permute.xlu0 %585
  %588 = vset.pattern.permute.xlu0 2
  %589 = vperm.xlu0 %588, %v50
  %v590 = vpop.permute.xlu0 %589
  %592 = vset.pattern.permute.xlu0 2
  %593 = vperm.xlu0 %592, %v51
  %v594 = vpop.permute.xlu0 %593
  %596 = vset.pattern.permute.xlu0 2
  %597 = vperm.xlu0 %596, %v52
  %v598 = vpop.permute.xlu0 %597
  %v600 = vperm.slane %v53, 2
  %v601 = vmul.f32 %v474, %v600
  %v602 = vmul.f32 %v478, %v600
  %v603 = vmul.f32 %v482, %v600
  %v604 = vmul.f32 %v486, %v600
  %v605 = vmul.f32 %v490, %v600
  %v606 = vmul.f32 %v494, %v600
  %v607 = vmul.f32 %v498, %v600
  %v608 = vmul.f32 %v502, %v600
  %v609 = vmul.f32 %v506, %v600
  %v610 = vmul.f32 %v510, %v600
  %v611 = vmul.f32 %v514, %v600
  %v612 = vmul.f32 %v518, %v600
  %v613 = vmul.f32 %v522, %v600
  %v614 = vmul.f32 %v526, %v600
  %v615 = vmul.f32 %v530, %v600
  %v616 = vmul.f32 %v534, %v600
  %v617 = vmul.f32 %v538, %v600
  %v618 = vmul.f32 %v542, %v600
  %v619 = vmul.f32 %v546, %v600
  %v620 = vmul.f32 %v550, %v600
  %v621 = vmul.f32 %v554, %v600
  %v622 = vmul.f32 %v558, %v600
  %v623 = vmul.f32 %v562, %v600
  %v624 = vmul.f32 %v566, %v600
  %v625 = vmul.f32 %v570, %v600
  %v626 = vmul.f32 %v574, %v600
  %v627 = vmul.f32 %v578, %v600
  %v628 = vmul.f32 %v582, %v600
  %v629 = vmul.f32 %v586, %v600
  %v630 = vmul.f32 %v590, %v600
  %v631 = vmul.f32 %v594, %v600
  %v632 = vmul.f32 %v598, %v600
  %v633 = vadd.f32 %v440, %v601
  %v634 = vadd.f32 %v441, %v602
  %v635 = vadd.f32 %v442, %v603
  %v636 = vadd.f32 %v443, %v604
  %v637 = vadd.f32 %v444, %v605
  %v638 = vadd.f32 %v445, %v606
  %v639 = vadd.f32 %v446, %v607
  %v640 = vadd.f32 %v447, %v608
  %v641 = vadd.f32 %v448, %v609
  %v642 = vadd.f32 %v449, %v610
  %v643 = vadd.f32 %v450, %v611
  %v644 = vadd.f32 %v451, %v612
  %v645 = vadd.f32 %v452, %v613
  %v646 = vadd.f32 %v453, %v614
  %v647 = vadd.f32 %v454, %v615
  %v648 = vadd.f32 %v455, %v616
  %v649 = vadd.f32 %v456, %v617
  %v650 = vadd.f32 %v457, %v618
  %v651 = vadd.f32 %v458, %v619
  %v652 = vadd.f32 %v459, %v620
  %v653 = vadd.f32 %v460, %v621
  %v654 = vadd.f32 %v461, %v622
  %v655 = vadd.f32 %v462, %v623
  %v656 = vadd.f32 %v463, %v624
  %v657 = vadd.f32 %v464, %v625
  %v658 = vadd.f32 %v465, %v626
  %v659 = vadd.f32 %v466, %v627
  %v660 = vadd.f32 %v467, %v628
  %v661 = vadd.f32 %v468, %v629
  %v662 = vadd.f32 %v469, %v630
  %v663 = vadd.f32 %v470, %v631
  %v664 = vadd.f32 %v471, %v632
  %v665 = vld [vmem:[%s2] sm:$0x1]
  %v667 = vperm.slane %v665, 0
  %v669 = vadd.f32 %v633, %v667
  %v670 = vadd.f32 %v634, %v667
  %v671 = vadd.f32 %v635, %v667
  %v672 = vadd.f32 %v636, %v667
  %v673 = vadd.f32 %v637, %v667
  %v674 = vadd.f32 %v638, %v667
  %v675 = vadd.f32 %v639, %v667
  %v676 = vadd.f32 %v640, %v667
  %v677 = vadd.f32 %v641, %v667
  %v678 = vadd.f32 %v642, %v667
  %v679 = vadd.f32 %v643, %v667
  %v680 = vadd.f32 %v644, %v667
  %v681 = vadd.f32 %v645, %v667
  %v682 = vadd.f32 %v646, %v667
  %v683 = vadd.f32 %v647, %v667
  %v684 = vadd.f32 %v648, %v667
  %v685 = vadd.f32 %v649, %v667
  %v686 = vadd.f32 %v650, %v667
  %v687 = vadd.f32 %v651, %v667
  %v688 = vadd.f32 %v652, %v667
  %v689 = vadd.f32 %v653, %v667
  %v690 = vadd.f32 %v654, %v667
  %v691 = vadd.f32 %v655, %v667
  %v692 = vadd.f32 %v656, %v667
  %v693 = vadd.f32 %v657, %v667
  %v694 = vadd.f32 %v658, %v667
  %v695 = vadd.f32 %v659, %v667
  %v696 = vadd.f32 %v660, %v667
  %v697 = vadd.f32 %v661, %v667
  %v698 = vadd.f32 %v662, %v667
  %v699 = vadd.f32 %v663, %v667
  %v700 = vadd.f32 %v664, %v667
  %v701 = vmax.f32 %v669, 0.0
  %v702 = vmax.f32 %v670, 0.0
  %v703 = vmax.f32 %v671, 0.0
  %v704 = vmax.f32 %v672, 0.0
  %v705 = vmax.f32 %v673, 0.0
  %v706 = vmax.f32 %v674, 0.0
  %v707 = vmax.f32 %v675, 0.0
  %v708 = vmax.f32 %v676, 0.0
  %v709 = vmax.f32 %v677, 0.0
  %v710 = vmax.f32 %v678, 0.0
  %v711 = vmax.f32 %v679, 0.0
  %v712 = vmax.f32 %v680, 0.0
  %v713 = vmax.f32 %v681, 0.0
  %v714 = vmax.f32 %v682, 0.0
  %v715 = vmax.f32 %v683, 0.0
  %v716 = vmax.f32 %v684, 0.0
  %v717 = vmax.f32 %v685, 0.0
  %v718 = vmax.f32 %v686, 0.0
  %v719 = vmax.f32 %v687, 0.0
  %v720 = vmax.f32 %v688, 0.0
  %v721 = vmax.f32 %v689, 0.0
  %v722 = vmax.f32 %v690, 0.0
  %v723 = vmax.f32 %v691, 0.0
  %v724 = vmax.f32 %v692, 0.0
  %v725 = vmax.f32 %v693, 0.0
  %v726 = vmax.f32 %v694, 0.0
  %v727 = vmax.f32 %v695, 0.0
  %v728 = vmax.f32 %v696, 0.0
  %v729 = vmax.f32 %v697, 0.0
  %v730 = vmax.f32 %v698, 0.0
  %v731 = vmax.f32 %v699, 0.0
  %v732 = vmax.f32 %v700, 0.0
  %v733 = vpack.c.bf16 %v702, %v701
  %v734 = vpack.c.bf16 %v704, %v703
  %v735 = vpack.c.bf16 %v706, %v705
  %v736 = vpack.c.bf16 %v708, %v707
  %v737 = vpack.c.bf16 %v710, %v709
  %v738 = vpack.c.bf16 %v712, %v711
  %v739 = vpack.c.bf16 %v714, %v713
  %v740 = vpack.c.bf16 %v716, %v715
  %v741 = vpack.c.bf16 %v718, %v717
  %v742 = vpack.c.bf16 %v720, %v719
  %v743 = vpack.c.bf16 %v722, %v721
  %v744 = vpack.c.bf16 %v724, %v723
  %v745 = vpack.c.bf16 %v726, %v725
  %v746 = vpack.c.bf16 %v728, %v727
  %v747 = vpack.c.bf16 %v730, %v729
  %v748 = vpack.c.bf16 %v732, %v731
  %v749 = vld [vmem:[%s3] sm:$0xf]
  %v750 = vld [vmem:[%s3 + $0x4] sm:$0xf]
  %v751 = vld [vmem:[%s3 + $0x8] sm:$0xf]
  %v752 = vld [vmem:[%s3 + $0xc] sm:$0xf]
  %v753 = vld [vmem:[%s4] sm:$0x1]
  %v755 = vperm.slane %v753, 0
  %v761 = vunpack.c.l.b16 %v749
  %v762 = vunpack.c.l.b16 %v750
  %v763 = vunpack.c.l.b16 %v751
  %v764 = vunpack.c.l.b16 %v752
  %v765 = vpack.c.b16 %v762, %v761
  %v766 = vpack.c.b16 %v764, %v763
  %vm769 = vcmask 261120
  %v771 = vsel %vm769, %v733, 0
  %v774 = vsel %vm769, %v734, 0
  %v777 = vsel %vm769, %v735, 0
  %v780 = vsel %vm769, %v736, 0
  %v783 = vsel %vm769, %v737, 0
  %v786 = vsel %vm769, %v738, 0
  %v789 = vsel %vm769, %v739, 0
  %v792 = vsel %vm769, %v740, 0
  %v795 = vsel %vm769, %v741, 0
  %v798 = vsel %vm769, %v742, 0
  %v801 = vsel %vm769, %v743, 0
  %v804 = vsel %vm769, %v744, 0
  %v807 = vsel %vm769, %v745, 0
  %v810 = vsel %vm769, %v746, 0
  %v813 = vsel %vm769, %v747, 0
  %v816 = vsel %vm769, %v748, 0
  %818 = vmatpush.bf16.msra.mxu0 0
  %819 = vmatpush.bf16.msra.mxu0 0
  %820 = vmatpush.bf16.msra.mxu0 0
  %821 = vmatpush.bf16.msra.mxu0 0
  %822 = vmatpush.bf16.msra.mxu0 0
  %823 = vmatpush.bf16.msra.mxu0 0
  %824 = vmatpush.bf16.msra.mxu0 %v766
  %825 = vmatpush.bf16.msra.mxu0 %v765
  %826 = vmatmul.bf16.gmra.mxu0 %v771
  %v827 = vpop.f32.mrf.mxu0
  %v828 = vadd.f32 %v755, %v827
  %v829 = vpop.f32.mrf.mxu0
  %v830 = vadd.f32 %v755, %v829
  %831 = vmatmul.bf16.gmra.mxu0 %v774
  %v832 = vpop.f32.mrf.mxu0
  %v833 = vadd.f32 %v755, %v832
  %v834 = vpop.f32.mrf.mxu0
  %v835 = vadd.f32 %v755, %v834
  %836 = vmatmul.bf16.gmra.mxu0 %v777
  %v837 = vpop.f32.mrf.mxu0
  %v838 = vadd.f32 %v755, %v837
  %v839 = vpop.f32.mrf.mxu0
  %v840 = vadd.f32 %v755, %v839
  %841 = vmatmul.bf16.gmra.mxu0 %v780
  %v842 = vpop.f32.mrf.mxu0
  %v843 = vadd.f32 %v755, %v842
  %v844 = vpop.f32.mrf.mxu0
  %v845 = vadd.f32 %v755, %v844
  %846 = vmatmul.bf16.gmra.mxu0 %v783
  %v847 = vpop.f32.mrf.mxu0
  %v848 = vadd.f32 %v755, %v847
  %v849 = vpop.f32.mrf.mxu0
  %v850 = vadd.f32 %v755, %v849
  %851 = vmatmul.bf16.gmra.mxu0 %v786
  %v852 = vpop.f32.mrf.mxu0
  %v853 = vadd.f32 %v755, %v852
  %v854 = vpop.f32.mrf.mxu0
  %v855 = vadd.f32 %v755, %v854
  %856 = vmatmul.bf16.gmra.mxu0 %v789
  %v857 = vpop.f32.mrf.mxu0
  %v858 = vadd.f32 %v755, %v857
  %v859 = vpop.f32.mrf.mxu0
  %v860 = vadd.f32 %v755, %v859
  %861 = vmatmul.bf16.gmra.mxu0 %v792
  %v862 = vpop.f32.mrf.mxu0
  %v863 = vadd.f32 %v755, %v862
  %v864 = vpop.f32.mrf.mxu0
  %v865 = vadd.f32 %v755, %v864
  %866 = vmatmul.bf16.gmra.mxu0 %v795
  %v867 = vpop.f32.mrf.mxu0
  %v868 = vadd.f32 %v755, %v867
  %v869 = vpop.f32.mrf.mxu0
  %v870 = vadd.f32 %v755, %v869
  %871 = vmatmul.bf16.gmra.mxu0 %v798
  %v872 = vpop.f32.mrf.mxu0
  %v873 = vadd.f32 %v755, %v872
  %v874 = vpop.f32.mrf.mxu0
  %v875 = vadd.f32 %v755, %v874
  %876 = vmatmul.bf16.gmra.mxu0 %v801
  %v877 = vpop.f32.mrf.mxu0
  %v878 = vadd.f32 %v755, %v877
  %v879 = vpop.f32.mrf.mxu0
  %v880 = vadd.f32 %v755, %v879
  %881 = vmatmul.bf16.gmra.mxu0 %v804
  %v882 = vpop.f32.mrf.mxu0
  %v883 = vadd.f32 %v755, %v882
  %v884 = vpop.f32.mrf.mxu0
  %v885 = vadd.f32 %v755, %v884
  %886 = vmatmul.bf16.gmra.mxu0 %v807
  %v887 = vpop.f32.mrf.mxu0
  %v888 = vadd.f32 %v755, %v887
  %v889 = vpop.f32.mrf.mxu0
  %v890 = vadd.f32 %v755, %v889
  %891 = vmatmul.bf16.gmra.mxu0 %v810
  %v892 = vpop.f32.mrf.mxu0
  %v893 = vadd.f32 %v755, %v892
  %v894 = vpop.f32.mrf.mxu0
  %v895 = vadd.f32 %v755, %v894
  %896 = vmatmul.bf16.gmra.mxu0 %v813
  %v897 = vpop.f32.mrf.mxu0
  %v898 = vadd.f32 %v755, %v897
  %v899 = vpop.f32.mrf.mxu0
  %v900 = vadd.f32 %v755, %v899
  %901 = vmatmul.bf16.gmra.mxu0 %v816
  %v902 = vpop.f32.mrf.mxu0
  %v903 = vadd.f32 %v755, %v902
  %v904 = vpop.f32.mrf.mxu0
  %v905 = vadd.f32 %v755, %v904
  %906 = vdwg.mxu0
  %v907 = vpack.c.bf16 %v828, %v828
  %v908 = vpack.c.bf16 %v830, %v830
  %v909 = vpack.c.bf16 %v833, %v833
  %v910 = vpack.c.bf16 %v835, %v835
  %v911 = vpack.c.bf16 %v838, %v838
  %v912 = vpack.c.bf16 %v840, %v840
  %v913 = vpack.c.bf16 %v843, %v843
  %v914 = vpack.c.bf16 %v845, %v845
  %v915 = vpack.c.bf16 %v848, %v848
  %v916 = vpack.c.bf16 %v850, %v850
  %v917 = vpack.c.bf16 %v853, %v853
  %v918 = vpack.c.bf16 %v855, %v855
  %v919 = vpack.c.bf16 %v858, %v858
  %v920 = vpack.c.bf16 %v860, %v860
  %v921 = vpack.c.bf16 %v863, %v863
  %v922 = vpack.c.bf16 %v865, %v865
  %v923 = vpack.c.bf16 %v868, %v868
  %v924 = vpack.c.bf16 %v870, %v870
  %v925 = vpack.c.bf16 %v873, %v873
  %v926 = vpack.c.bf16 %v875, %v875
  %v927 = vpack.c.bf16 %v878, %v878
  %v928 = vpack.c.bf16 %v880, %v880
  %v929 = vpack.c.bf16 %v883, %v883
  %v930 = vpack.c.bf16 %v885, %v885
  %v931 = vpack.c.bf16 %v888, %v888
  %v932 = vpack.c.bf16 %v890, %v890
  %v933 = vpack.c.bf16 %v893, %v893
  %v934 = vpack.c.bf16 %v895, %v895
  %v935 = vpack.c.bf16 %v898, %v898
  %v936 = vpack.c.bf16 %v900, %v900
  %v937 = vpack.c.bf16 %v903, %v903
  %v938 = vpack.c.bf16 %v905, %v905
  %vm939 = vcmask 257024
  %940 = vst.msk [vmem:[%s5] sm:$0xf] %vm939, %v907
  %941 = vst.msk [vmem:[%s5 + $0x4] sm:$0xf] %vm939, %v908
  %942 = vst.msk [vmem:[%s5 + $0x8] sm:$0xf] %vm939, %v909
  %943 = vst.msk [vmem:[%s5 + $0xc] sm:$0xf] %vm939, %v910
  %944 = vst.msk [vmem:[%s5 + $0x10] sm:$0xf] %vm939, %v911
  %945 = vst.msk [vmem:[%s5 + $0x14] sm:$0xf] %vm939, %v912
  %946 = vst.msk [vmem:[%s5 + $0x18] sm:$0xf] %vm939, %v913
  %947 = vst.msk [vmem:[%s5 + $0x1c] sm:$0xf] %vm939, %v914
  %948 = vst.msk [vmem:[%s5 + $0x20] sm:$0xf] %vm939, %v915
  %949 = vst.msk [vmem:[%s5 + $0x24] sm:$0xf] %vm939, %v916
  %950 = vst.msk [vmem:[%s5 + $0x28] sm:$0xf] %vm939, %v917
  %951 = vst.msk [vmem:[%s5 + $0x2c] sm:$0xf] %vm939, %v918
  %952 = vst.msk [vmem:[%s5 + $0x30] sm:$0xf] %vm939, %v919
  %953 = vst.msk [vmem:[%s5 + $0x34] sm:$0xf] %vm939, %v920
  %954 = vst.msk [vmem:[%s5 + $0x38] sm:$0xf] %vm939, %v921
  %955 = vst.msk [vmem:[%s5 + $0x3c] sm:$0xf] %vm939, %v922
  %956 = vst.msk [vmem:[%s5 + $0x40] sm:$0xf] %vm939, %v923
  %957 = vst.msk [vmem:[%s5 + $0x44] sm:$0xf] %vm939, %v924
  %958 = vst.msk [vmem:[%s5 + $0x48] sm:$0xf] %vm939, %v925
  %959 = vst.msk [vmem:[%s5 + $0x4c] sm:$0xf] %vm939, %v926
  %960 = vst.msk [vmem:[%s5 + $0x50] sm:$0xf] %vm939, %v927
  %961 = vst.msk [vmem:[%s5 + $0x54] sm:$0xf] %vm939, %v928
  %962 = vst.msk [vmem:[%s5 + $0x58] sm:$0xf] %vm939, %v929
  %963 = vst.msk [vmem:[%s5 + $0x5c] sm:$0xf] %vm939, %v930
  %964 = vst.msk [vmem:[%s5 + $0x60] sm:$0xf] %vm939, %v931
  %965 = vst.msk [vmem:[%s5 + $0x64] sm:$0xf] %vm939, %v932
  %966 = vst.msk [vmem:[%s5 + $0x68] sm:$0xf] %vm939, %v933
  %967 = vst.msk [vmem:[%s5 + $0x6c] sm:$0xf] %vm939, %v934
  %968 = vst.msk [vmem:[%s5 + $0x70] sm:$0xf] %vm939, %v935
  %969 = vst.msk [vmem:[%s5 + $0x74] sm:$0xf] %vm939, %v936
  %970 = vst.msk [vmem:[%s5 + $0x78] sm:$0xf] %vm939, %v937
  %971 = vst.msk [vmem:[%s5 + $0x7c] sm:$0xf] %vm939, %v938
  // Predicated region
  $region22: #{tpu_custom_call.1} parent=0 // pred_check
    _
  $region23: #{tpu_custom_call.1} parent=0 // pred_check_branch
    %973 = sbr.rel (0) target = $region25
  $region24: #{tpu_custom_call.1} parent=0 // pred_region
    _
  $region25: #{tpu_custom_call.1} parent=0 // pred_fallthru
    _
  // Predicated region
  $region26: #{tpu_custom_call.1} parent=0 // pred_check
    _
  $region27: #{tpu_custom_call.1} parent=0 // pred_check_branch
    %975 = sbr.rel (0) target = $region29
  $region28: #{tpu_custom_call.1} parent=0 // pred_region
    _
  $region29: #{tpu_custom_call.1} parent=0 // pred_fallthru
    _

</llo_original>
